<compile_context>
chip_gen: v7x
topology: tpu7x:2x2x1
jax: 0.10.0
libtpu: 0.0.40
codegen_flags: <defaults>
</compile_context>

<pallas_src>
import math

import jax
import jax.numpy as jnp
from jax.experimental import pallas as pl
from jax.experimental.pallas import tpu as pltpu

d_k = d_v = 2  # matches the PyTorch module's globals


def _round_up(x, m):
    return ((x + m - 1) // m) * m


def _vmem_limits():
    """Generation-aware scoped-VMEM limit + tile-picking budget."""
    try:
        cap = getattr(pltpu.get_tpu_info(), "vmem_capacity_bytes", None)
    except Exception:
        cap = None
    if not cap:
        cap = 64 * 1024 * 1024                      # v7x floor: safe everywhere
    limit = min((cap * 3) // 4, 100 * 1024 * 1024)  # ~48 MiB v7x, ~96 MiB v5e/v6e
    budget = (limit * 4) // 5                       # headroom for Mosaic internals
    return int(limit), int(budget)


def _step_bytes(g, tq, lkp, in_item, attn_item):
    """Per-grid-step VMEM: padded layouts, double buffering, f32 temporaries."""
    tq8 = _round_up(tq, 8)
    tq128 = _round_up(tq, 128)
    attn_out = 2 * g * tq8 * lkp * attn_item        # attn block, 2 buffers
    kv_in = 2 * 2 * g * 8 * lkp * in_item           # K,V blocks (d -> 8 sublanes)
    q_in = 2 * g * tq8 * 128 * in_item              # Q block (d lane-padded to 128)
    ctx_out = 2 * g * 8 * tq128 * in_item           # ctx block (d -> 8 sublanes)
    temps = g * tq8 * lkp * (3 * 4 + attn_item)     # scores / exp / attn f32 + cast
    small = 3 * g * tq8 * 128 * 4                   # q(f32), m, denom, inv, ...
    return attn_out + kv_in + q_in + ctx_out + temps + small


def _pick_tiles(bh, len_q, lkp, in_item, attn_item, budget):
    """Pick (G heads/step, TQ q-rows/step, padded LQ)."""
    divs = [d for d in range(1, min(bh, 8) + 1) if bh % d == 0]
    pref = [d for d in divs if bh // d >= 2] or divs   # keep >=2 grid steps (megacore)
    for g in sorted(pref, reverse=True):
        if _step_bytes(g, len_q, lkp, in_item, attn_item) <= budget:
            return g, len_q, len_q                     # whole q axis in one block
        tq = (len_q // 128) * 128                      # tiled TQ must be a 128-multiple
        while tq >= 128:
            if _step_bytes(g, tq, lkp, in_item, attn_item) <= budget:
                return g, tq, _round_up(len_q, tq)
            tq -= 128
    # Fallback for extreme len_k: smallest expressible tile; the limit has headroom.
    if len_q <= 128:
        return 1, len_q, len_q
    return 1, 128, _round_up(len_q, 128)


def _make_kernel(lk_valid, lkp):
    def kernel(q_ref, k_ref, v_ref, ctx_ref, attn_ref):
        # q_ref:   [G, TQ, d_k]   (tiny block; d_k on lanes)
        # k_ref:   [G, d_k, LKP]  (len_k lane-dense)
        # v_ref:   [G, d_v, LKP]
        # ctx_ref: [G, d_v, TQ]   (lane-dense stores)
        # attn_ref:[G, TQ, LKP]   (lane-dense stores; dominant writeback)
        dk = q_ref.shape[-1]
        scale = jnp.float32(1.0 / math.sqrt(dk))
        q = q_ref[...].astype(jnp.float32) * scale      # fold scale into tiny q tile
        k = k_ref[...].astype(jnp.float32)

        # Q.K^T on the VPU: one broadcast mul-add per d.  (An MXU contraction of
        # depth 2 would run at ~1-2% utilization and force padded relayouts.)
        scores = q[:, :, 0:1] * k[:, 0:1, :]
        for d in range(1, dk):
            scores = scores + q[:, :, d:d + 1] * k[:, d:d + 1, :]

        if lk_valid < lkp:                              # mask zero-padded key columns
            col = jax.lax.broadcasted_iota(jnp.int32, scores.shape, 2)
            scores = jnp.where(col < lk_valid, scores, -jnp.inf)

        # Numerically stable softmax with an EXACT reciprocal (attn is user-visible).
        m = jnp.max(scores, axis=-1, keepdims=True)
        e = jnp.exp(scores - m)
        denom = jnp.sum(e, axis=-1, keepdims=True)
        attn = e * (1.0 / denom)
        attn_ref[...] = attn.astype(attn_ref.dtype)     # store as soon as it is formed

        v = v_ref[...]
        attn_mm = attn if v.dtype == jnp.float32 else attn.astype(v.dtype)
        # context^T = V^T-layout . attn (contraction over len_k, MXU-friendly),
        # emitted as [G, d_v, TQ] so the ctx store is lane-dense.
        ctx = jnp.einsum("gdk,gqk->gdq", v, attn_mm,
                         preferred_element_type=jnp.float32)
        ctx_ref[...] = ctx.astype(ctx_ref.dtype)

    return kernel


def scaled_dot_product_attention(Q, K, V, attn_dtype=None):
    """Q: [B, H, len_q, d_k], K: [B, H, len_k, d_k], V: [B, H, len_k, d_v].

    Returns (context [B, H, len_q, d_v], attn [B, H, len_q, len_k]).
    attn_dtype: optionally emit attn in a narrower dtype (e.g. bf16) to halve the
    dominant HBM writeback on v5e/v6e; default keeps the module's Q.dtype output.
    """
    B, H, len_q, dk = Q.shape
    len_k = K.shape[2]
    dv = V.shape[-1]
    BH = B * H
    out_dtype = Q.dtype
    attn_dtype = out_dtype if attn_dtype is None else jnp.dtype(attn_dtype)

    lkp = _round_up(len_k, 128)                     # lane-dense attn writeback
    in_item = jnp.dtype(Q.dtype).itemsize
    attn_item = jnp.dtype(attn_dtype).itemsize
    vmem_limit, budget = _vmem_limits()
    G, TQ, LQP = _pick_tiles(BH, len_q, lkp, in_item, attn_item, budget)

    q = Q.reshape(BH, len_q, dk)
    if LQP != len_q:
        q = jnp.pad(q, ((0, 0), (0, LQP - len_q), (0, 0)))
    # Put the length axis on lanes for K/V (a [*, 2] minor dim is lane-padded ~64x).
    kT = jnp.swapaxes(K.reshape(BH, len_k, dk), 1, 2)   # [BH, d_k, len_k]
    vT = jnp.swapaxes(V.reshape(BH, len_k, dv), 1, 2)   # [BH, d_v, len_k]
    if lkp != len_k:
        pad = ((0, 0), (0, 0), (0, lkp - len_k))
        kT = jnp.pad(kT, pad)
        vT = jnp.pad(vT, pad)

    grid = (BH // G, LQP // TQ)

    flops = 2 * BH * len_q * len_k * (dk + dv)
    bytes_accessed = (in_item * (q.size + kT.size + vT.size + BH * LQP * dv)
                      + attn_item * BH * LQP * lkp)
    cost = pl.CostEstimate(flops=flops, transcendentals=BH * LQP * lkp,
                           bytes_accessed=bytes_accessed)

    ctx_t, attn = pl.pallas_call(
        _make_kernel(len_k, lkp),
        out_shape=(
            jax.ShapeDtypeStruct((BH, dv, LQP), out_dtype),
            jax.ShapeDtypeStruct((BH, LQP, lkp), attn_dtype),
        ),
        grid_spec=pltpu.PrefetchScalarGridSpec(
            num_scalar_prefetch=0,
            grid=grid,
            in_specs=[
                pl.BlockSpec((G, TQ, dk), lambda g, i: (g, i, 0)),
                pl.BlockSpec((G, dk, lkp), lambda g, i: (g, 0, 0)),
                pl.BlockSpec((G, dv, lkp), lambda g, i: (g, 0, 0)),
            ],
            out_specs=[
                pl.BlockSpec((G, dv, TQ), lambda g, i: (g, 0, i)),
                pl.BlockSpec((G, TQ, lkp), lambda g, i: (g, i, 0)),
            ],
        ),
        compiler_params=pltpu.CompilerParams(
            dimension_semantics=("parallel", "parallel"),
            vmem_limit_bytes=vmem_limit,
        ),
        cost_estimate=cost,
    )(q, kT, vT)

    context = jnp.swapaxes(ctx_t, 1, 2)[:, :len_q, :].reshape(B, H, len_q, dv)
    attn = attn[:, :len_q, :len_k].reshape(B, H, len_q, len_k)
    return context, attn


if __name__ == "__main__":
    # Small deterministic inputs consistent with the module's shape conventions.
    B, H, L = 2, 4, 8
    key = jax.random.PRNGKey(0)
    kq, kk, kv = jax.random.split(key, 3)
    Q = jax.random.normal(kq, (B, H, L, d_k), dtype=jnp.float32)
    K = jax.random.normal(kk, (B, H, L, d_k), dtype=jnp.float32)
    V = jax.random.normal(kv, (B, H, L, d_v), dtype=jnp.float32)

    context, attn = scaled_dot_product_attention(Q, K, V)
    jax.block_until_ready((context, attn))

    # Reference check (plain JAX) to verify the forward semantics.
    scores_ref = jnp.einsum("bhqd,bhkd->bhqk", Q, K) / jnp.sqrt(jnp.float32(d_k))
    attn_ref = jax.nn.softmax(scores_ref, axis=-1)
    ctx_ref = jnp.einsum("bhqk,bhkd->bhqd", attn_ref, V)
    assert jnp.allclose(attn, attn_ref, atol=1e-4, rtol=1e-4), "attn mismatch"
    assert jnp.allclose(context, ctx_ref, atol=1e-4, rtol=1e-4), "context mismatch"

    print("KERNEL_OK")
</pallas_src>

<mosaic_0001>
module attributes {stable_mosaic.version = 11 : i64} {
  func.func @kernel(%arg0: i32, %arg1: i32, %arg2: memref<4x8x2xf32, #tpu.memory_space<vmem>>, %arg3: memref<4x2x128xf32, #tpu.memory_space<vmem>>, %arg4: memref<4x2x128xf32, #tpu.memory_space<vmem>>, %arg5: memref<4x2x8xf32, #tpu.memory_space<vmem>>, %arg6: memref<4x8x128xf32, #tpu.memory_space<vmem>>) attributes {dimension_semantics = [#tpu.dimension_semantics<parallel>, #tpu.dimension_semantics<parallel>], iteration_bounds = array<i64: 2, 1>, scalar_prefetch = 0 : i64, scratch_operands = 0 : i64, tpu.core_type = #tpu.core_type<tc>, window_params = [{transform_indices = @transform_0, window_bounds = array<i64: 4, 8, 2>}, {transform_indices = @transform_1, window_bounds = array<i64: 4, 2, 128>}, {transform_indices = @transform_2, window_bounds = array<i64: 4, 2, 128>}, {transform_indices = @transform_3, window_bounds = array<i64: 4, 2, 8>}, {transform_indices = @transform_4, window_bounds = array<i64: 4, 8, 128>}]} {
    %c0 = arith.constant 0 : index
    %c0_0 = arith.constant 0 : index
    %c0_1 = arith.constant 0 : index
    %0 = vector.load %arg2[%c0, %c0_0, %c0_1] : memref<4x8x2xf32, #tpu.memory_space<vmem>>, vector<4x8x2xf32>
    %cst = arith.constant 0.707106769 : f32
    %1 = vector.broadcast %cst : f32 to vector<4x8x2xf32>
    %2 = arith.mulf %0, %1 : vector<4x8x2xf32>
    %c0_2 = arith.constant 0 : index
    %c0_3 = arith.constant 0 : index
    %c0_4 = arith.constant 0 : index
    %3 = vector.load %arg3[%c0_2, %c0_3, %c0_4] : memref<4x2x128xf32, #tpu.memory_space<vmem>>, vector<4x2x128xf32>
    %4 = vector.extract_strided_slice %2 {offsets = [0, 0, 0], sizes = [4, 8, 1], strides = [1, 1, 1]} : vector<4x8x2xf32> to vector<4x8x1xf32>
    %5 = vector.extract_strided_slice %3 {offsets = [0, 0, 0], sizes = [4, 1, 128], strides = [1, 1, 1]} : vector<4x2x128xf32> to vector<4x1x128xf32>
    %6 = vector.broadcast %4 : vector<4x8x1xf32> to vector<4x8x128xf32>
    %7 = vector.broadcast %5 : vector<4x1x128xf32> to vector<4x8x128xf32>
    %8 = arith.mulf %6, %7 : vector<4x8x128xf32>
    %9 = vector.extract_strided_slice %2 {offsets = [0, 0, 1], sizes = [4, 8, 1], strides = [1, 1, 1]} : vector<4x8x2xf32> to vector<4x8x1xf32>
    %10 = vector.extract_strided_slice %3 {offsets = [0, 1, 0], sizes = [4, 1, 128], strides = [1, 1, 1]} : vector<4x2x128xf32> to vector<4x1x128xf32>
    %11 = vector.broadcast %9 : vector<4x8x1xf32> to vector<4x8x128xf32>
    %12 = vector.broadcast %10 : vector<4x1x128xf32> to vector<4x8x128xf32>
    %13 = arith.mulf %11, %12 : vector<4x8x128xf32>
    %14 = arith.addf %8, %13 : vector<4x8x128xf32>
    %15 = tpu.iota {dimensions = array<i32: 2>} : vector<4x8x128xi32>
    %c8_i32 = arith.constant 8 : i32
    %16 = vector.broadcast %c8_i32 : i32 to vector<4x8x128xi32>
    %17 = arith.cmpi slt, %15, %16 : vector<4x8x128xi32>
    %cst_5 = arith.constant 0xFF800000 : f32
    %18 = vector.broadcast %cst_5 : f32 to vector<4x8x128xf32>
    %19 = arith.select %17, %14, %18 : vector<4x8x128xi1>, vector<4x8x128xf32>
    %cst_6 = arith.constant dense<0xFF800000> : vector<4x8xf32>
    %20 = vector.multi_reduction <maximumf>, %19, %cst_6 [2] : vector<4x8x128xf32> to vector<4x8xf32>
    %21 = vector.shape_cast %20 : vector<4x8xf32> to vector<4x8x1xf32>
    %22 = vector.broadcast %21 : vector<4x8x1xf32> to vector<4x8x128xf32>
    %23 = arith.subf %19, %22 : vector<4x8x128xf32>
    %24 = math.exp %23 : vector<4x8x128xf32>
    %cst_7 = arith.constant dense<0.000000e+00> : vector<4x8xf32>
    %25 = vector.multi_reduction <add>, %24, %cst_7 [2] : vector<4x8x128xf32> to vector<4x8xf32>
    %26 = vector.shape_cast %25 : vector<4x8xf32> to vector<4x8x1xf32>
    %cst_8 = arith.constant 1.000000e+00 : f32
    %27 = vector.broadcast %cst_8 : f32 to vector<4x8x1xf32>
    %28 = arith.divf %27, %26 : vector<4x8x1xf32>
    %29 = vector.broadcast %28 : vector<4x8x1xf32> to vector<4x8x128xf32>
    %30 = arith.mulf %24, %29 : vector<4x8x128xf32>
    %c0_9 = arith.constant 0 : index
    %c0_10 = arith.constant 0 : index
    %c0_11 = arith.constant 0 : index
    %31 = vector.load %arg6[%c0_9, %c0_10, %c0_11] : memref<4x8x128xf32, #tpu.memory_space<vmem>>, vector<4x8x128xf32>
    tpu.vector_store %arg6[%c0_9, %c0_10, %c0_11], %30 {strides = array<i32>} : memref<4x8x128xf32, #tpu.memory_space<vmem>>, vector<4x8x128xf32>,
    %c0_12 = arith.constant 0 : index
    %c0_13 = arith.constant 0 : index
    %c0_14 = arith.constant 0 : index
    %32 = vector.load %arg4[%c0_12, %c0_13, %c0_14] : memref<4x2x128xf32, #tpu.memory_space<vmem>>, vector<4x2x128xf32>
    "tpu.trace_start"() <{level = 10 : i32, message = "gdk,gqk->gdq"}> : () -> ()
    %cst_15 = arith.constant dense<0.000000e+00> : vector<4x2x8xf32>
    %33 = tpu.matmul %32, %30, %cst_15 {dimension_numbers = #tpu.dot_dimension_numbers<[2], [2], [1], [1], [0, 0, 0, 1, 1, 1], [0], [0]>} : vector<4x2x128xf32>, vector<4x8x128xf32>, vector<4x2x8xf32> -> vector<4x2x8xf32>
    "tpu.trace_stop"() : () -> ()
    %c0_16 = arith.constant 0 : index
    %c0_17 = arith.constant 0 : index
    %c0_18 = arith.constant 0 : index
    %34 = vector.load %arg5[%c0_16, %c0_17, %c0_18] : memref<4x2x8xf32, #tpu.memory_space<vmem>>, vector<4x2x8xf32>
    tpu.vector_store %arg5[%c0_16, %c0_17, %c0_18], %33 {strides = array<i32>} : memref<4x2x8xf32, #tpu.memory_space<vmem>>, vector<4x2x8xf32>,
    return
  }
  func.func @transform_0(%arg0: i32, %arg1: i32) -> (i32, i32, i32) {
    %c0_i32 = arith.constant 0 : i32
    %c0_i32_0 = arith.constant 0 : i32
    return %arg0, %arg1, %c0_i32 : i32, i32, i32
  }
  func.func @transform_1(%arg0: i32, %arg1: i32) -> (i32, i32, i32) {
    %c0_i32 = arith.constant 0 : i32
    %c0_i32_0 = arith.constant 0 : i32
    %c0_i32_1 = arith.constant 0 : i32
    return %arg0, %c0_i32, %c0_i32_0 : i32, i32, i32
  }
  func.func @transform_2(%arg0: i32, %arg1: i32) -> (i32, i32, i32) {
    %c0_i32 = arith.constant 0 : i32
    %c0_i32_0 = arith.constant 0 : i32
    %c0_i32_1 = arith.constant 0 : i32
    return %arg0, %c0_i32, %c0_i32_0 : i32, i32, i32
  }
  func.func @transform_3(%arg0: i32, %arg1: i32) -> (i32, i32, i32) {
    %c0_i32 = arith.constant 0 : i32
    %c0_i32_0 = arith.constant 0 : i32
    return %arg0, %c0_i32, %arg1 : i32, i32, i32
  }
  func.func @transform_4(%arg0: i32, %arg1: i32) -> (i32, i32, i32) {
    %c0_i32 = arith.constant 0 : i32
    %c0_i32_0 = arith.constant 0 : i32
    return %arg0, %arg1, %c0_i32 : i32, i32, i32
  }
}

</mosaic_0001>

<llo_original>
// kernel: tpu_custom_call.1
$region0: #{tpu_custom_call.1}
  #allocation0 [shape = 'u32[]', space=smem, size = 0x4, offset = 0x4, fixed_abs, tag = 'smem constant byte address 0x4 - core index']
  #allocation1 [shape = 'u32[144,128]{1,0:T(1,128)}', space=vmem, size = 0x12000, scoped, tag = 'internal scratch']
  %s0 = inlined_call_operand.vmem [shape: f32[8,8,2], index: 0, kind: input, shape index: {}]
  %s1 = inlined_call_operand.vmem [shape: f32[8,2,128], index: 1, kind: input, shape index: {}]
  %s2 = inlined_call_operand.vmem [shape: f32[8,2,128], index: 2, kind: input, shape index: {}]
  %s3 = inlined_call_operand.hbm [shape: f32[8,2,8], index: 3, kind: output, shape index: {0}]
  %s4 = inlined_call_operand.hbm [shape: f32[8,8,128], index: 4, kind: output, shape index: {1}]
  %5 = xla_tuple %s3, %s4
  %s6 = sld [smem:[#allocation0]]
  $region53: #{tpu_custom_call.1} parent=0
    _
  %s8 = ssub.s32 1, %s6
  %s9 = scalar_select 0, %s8, %s6
  $region1: #{tpu_custom_call.1} parent=0
    #allocation2 [shape = 'u8[8192]{0}', space=vmem, size = 0x2000, scoped, tag = 'output window, operand 0']
    #allocation3 [shape = 's32[2]{0}', space=sflag, size = 0x8, scoped, tag = 'scoped memory for tpu_custom_call.1']
    #allocation4 [shape = 'u8[32768]{0}', space=vmem, size = 0x8000, scoped, tag = 'output window, operand 1']
    #allocation5 [shape = 's32[2]{0}', space=sflag, size = 0x8, scoped, tag = 'scoped memory for tpu_custom_call.1']
    %10 = vsyncpa [#allocation3], 0
    %s11 = scalar_lea.sflag [#allocation3], 1
    %12 = vsyncpa %s11, 0
    %13 = vsyncpa [#allocation5], 0
    %s14 = scalar_lea.sflag [#allocation5], 1
    %15 = vsyncpa %s14, 0
    loop: start=0, step=1, limit=4
    $region2: #{tpu_custom_call.1} parent=1 // loop_pre_header
      _
    $region3: #{tpu_custom_call.1} parent=1 // loop_header
      %s17 = sphi 0, %s21
      %p18 = scmp.ge.s32.totalorder %s17, 4
      %s24 = sphi 0, %s36
      %s25 = sphi 0, %s32
      %s26 = sphi 0, %s24
      %s27 = sphi 0, %s25
      %s28 = sphi 0, %s26
      %s29 = sphi 0, %s27
      %s41 = sphi 0, %s43
      %s44 = sphi 0, %s41
      %s45 = sphi 0, %s44
      %s61 = sphi 0, %s45
      %s67 = sphi 0, %s69
      %s70 = sphi 0, %s67
      %s71 = sphi 0, %s70
      %s87 = sphi 0, %s71
      %s93 = sphi 0, %s95
      %s96 = sphi 0, %s93
      %s97 = sphi 0, %s96
      %s113 = sphi 0, %s97
      %s121 = sphi 0, %s123
      %s124 = sphi 0, %s121
      %s125 = sphi 0, %s124
      %s141 = sphi 0, %s125
      %s149 = sphi 0, %s151
      %s152 = sphi 0, %s149
      %s153 = sphi 0, %s152
      %s169 = sphi 0, %s153
    $region4: #{tpu_custom_call.1} parent=1 // loop_header_branch
      %20 = sbr.rel (%p18) target = $region8
    $region5: #{tpu_custom_call.1} parent=1 // loop_body
      %s22 = ssub.s32 %s17, 1
      %s23 = ssub.s32 %s17, 2
      %s30 = sadd.s32 1, %s25
      %p31 = scmp.ge.s32.totalorder %s30, 1
      %s32 = scalar_select %p31, 0, %s30
      %s33 = sadd.s32 1, %s24
      %s34 = scalar_select %p31, %s33, %s24
      %p35 = scmp.ge.s32.totalorder %s34, 2
      %s36 = scalar_select %p35, 0, %s34
      %s37 = ssub.s32 %s24, %s36
      %s38 = ssub.s32 %s25, %s32
      %s39 = sor.u32 %s37, %s38
      %p40 = scmp.eq.s32.totalorder %s39, 0
      %s42 = sadd.s32 %s41, 1
      %s43 = scalar_select %p40, %s41, %s42
      %p46 = pneg %p40
      %p47 = scmp.eq.s32.totalorder %s17, 1
      %p48 = por %p46, %p47
      %p49 = scmp.ne.s32.totalorder %s41, %s44
      %p50 = scmp.eq.s32.totalorder %s17, 0
      %p51 = por %p49, %p50
      %p52 = scmp.ne.s32.totalorder %s41, %s44
      %p53 = scmp.eq.s32.totalorder %s22, 1
      %p54 = por %p52, %p53
      %p55 = scmp.ne.s32.totalorder %s44, %s45
      %p56 = scmp.eq.s32.totalorder %s22, 0
      %p57 = por %p55, %p56
      %p58 = scmp.ne.s32.totalorder %s44, %s45
      %p59 = scmp.eq.s32.totalorder %s23, 1
      %p60 = por %p58, %p59
      %p62 = scmp.ne.s32.totalorder %s45, %s61
      %p63 = scmp.eq.s32.totalorder %s23, 0
      %p64 = por %p62, %p63
      %s65 = ssub.s32 %s24, %s36
      %p66 = scmp.eq.s32.totalorder %s65, 0
      %s68 = sadd.s32 %s67, 1
      %s69 = scalar_select %p66, %s67, %s68
      %p72 = pneg %p66
      %p73 = scmp.eq.s32.totalorder %s17, 1
      %p74 = por %p72, %p73
      %p75 = scmp.ne.s32.totalorder %s67, %s70
      %p76 = scmp.eq.s32.totalorder %s17, 0
      %p77 = por %p75, %p76
      %p78 = scmp.ne.s32.totalorder %s67, %s70
      %p79 = scmp.eq.s32.totalorder %s22, 1
      %p80 = por %p78, %p79
      %p81 = scmp.ne.s32.totalorder %s70, %s71
      %p82 = scmp.eq.s32.totalorder %s22, 0
      %p83 = por %p81, %p82
      %p84 = scmp.ne.s32.totalorder %s70, %s71
      %p85 = scmp.eq.s32.totalorder %s23, 1
      %p86 = por %p84, %p85
      %p88 = scmp.ne.s32.totalorder %s71, %s87
      %p89 = scmp.eq.s32.totalorder %s23, 0
      %p90 = por %p88, %p89
      %s91 = ssub.s32 %s24, %s36
      %p92 = scmp.eq.s32.totalorder %s91, 0
      %s94 = sadd.s32 %s93, 1
      %s95 = scalar_select %p92, %s93, %s94
      %p98 = pneg %p92
      %p99 = scmp.eq.s32.totalorder %s17, 1
      %p100 = por %p98, %p99
      %p101 = scmp.ne.s32.totalorder %s93, %s96
      %p102 = scmp.eq.s32.totalorder %s17, 0
      %p103 = por %p101, %p102
      %p104 = scmp.ne.s32.totalorder %s93, %s96
      %p105 = scmp.eq.s32.totalorder %s22, 1
      %p106 = por %p104, %p105
      %p107 = scmp.ne.s32.totalorder %s96, %s97
      %p108 = scmp.eq.s32.totalorder %s22, 0
      %p109 = por %p107, %p108
      %p110 = scmp.ne.s32.totalorder %s96, %s97
      %p111 = scmp.eq.s32.totalorder %s23, 1
      %p112 = por %p110, %p111
      %p114 = scmp.ne.s32.totalorder %s97, %s113
      %p115 = scmp.eq.s32.totalorder %s23, 0
      %p116 = por %p114, %p115
      %s117 = ssub.s32 %s24, %s36
      %s118 = ssub.s32 %s25, %s32
      %s119 = sor.u32 %s117, %s118
      %p120 = scmp.eq.s32.totalorder %s119, 0
      %s122 = sadd.s32 %s121, 1
      %s123 = scalar_select %p120, %s121, %s122
      %p126 = pneg %p120
      %p127 = scmp.eq.s32.totalorder %s17, 1
      %p128 = por %p126, %p127
      %p129 = scmp.ne.s32.totalorder %s121, %s124
      %p130 = scmp.eq.s32.totalorder %s17, 0
      %p131 = por %p129, %p130
      %p132 = scmp.ne.s32.totalorder %s121, %s124
      %p133 = scmp.eq.s32.totalorder %s22, 1
      %p134 = por %p132, %p133
      %p135 = scmp.ne.s32.totalorder %s124, %s125
      %p136 = scmp.eq.s32.totalorder %s22, 0
      %p137 = por %p135, %p136
      %p138 = scmp.ne.s32.totalorder %s124, %s125
      %p139 = scmp.eq.s32.totalorder %s23, 1
      %p140 = por %p138, %p139
      %p142 = scmp.ne.s32.totalorder %s125, %s141
      %p143 = scmp.eq.s32.totalorder %s23, 0
      %p144 = por %p142, %p143
      %s145 = ssub.s32 %s24, %s36
      %s146 = ssub.s32 %s25, %s32
      %s147 = sor.u32 %s145, %s146
      %p148 = scmp.eq.s32.totalorder %s147, 0
      %s150 = sadd.s32 %s149, 1
      %s151 = scalar_select %p148, %s149, %s150
      %p154 = pneg %p148
      %p155 = scmp.eq.s32.totalorder %s17, 1
      %p156 = por %p154, %p155
      %p157 = scmp.ne.s32.totalorder %s149, %s152
      %p158 = scmp.eq.s32.totalorder %s17, 0
      %p159 = por %p157, %p158
      %p160 = scmp.ne.s32.totalorder %s149, %s152
      %p161 = scmp.eq.s32.totalorder %s22, 1
      %p162 = por %p160, %p161
      %p163 = scmp.ne.s32.totalorder %s152, %s153
      %p164 = scmp.eq.s32.totalorder %s22, 0
      %p165 = por %p163, %p164
      %p166 = scmp.ne.s32.totalorder %s152, %s153
      %p167 = scmp.eq.s32.totalorder %s23, 1
      %p168 = por %p166, %p167
      %p170 = scmp.ne.s32.totalorder %s153, %s169
      %p171 = scmp.eq.s32.totalorder %s23, 0
      %p172 = por %p170, %p171
      %p173 = scmp.le.s32.totalorder 1, %s17
      %p174 = scmp.lt.s32.totalorder %s17, 3
      %p175 = pnand %p173, %p174
      %p176 = pneg %p175
      // Predicated region
      $region9: #{tpu_custom_call.1} parent=5 // pred_check
        _
      $region10: #{tpu_custom_call.1} parent=5 // pred_check_branch
        %178 = sbr.rel (%p175) target = $region12
      $region11: #{tpu_custom_call.1} parent=5 // pred_region
        %s179 = ssub.s32 %s17, 1
      $region12: #{tpu_custom_call.1} parent=5 // pred_fallthru
        _
      %p180 = scmp.lt.s32.totalorder %s17, 2
      // Predicated region
      $region13: #{tpu_custom_call.1} parent=5 // pred_check
        %p181 = pneg %p180
      $region14: #{tpu_custom_call.1} parent=5 // pred_check_branch
        %183 = sbr.rel (%p181) target = $region16
      $region15: #{tpu_custom_call.1} parent=5 // pred_region
        // Predicated region
        $region17: #{tpu_custom_call.1} parent=15 // pred_check
          %p184 = pneg %p51
        $region18: #{tpu_custom_call.1} parent=15 // pred_check_branch
          %186 = sbr.rel (%p184) target = $region20
        $region19: #{tpu_custom_call.1} parent=15 // pred_region
          %s187 = smul.u32 4, %s24
          %p188 = scmp.lt.s32.totalorder %s187, 7
          %s189 = scalar_select %p188, %s187, 7
          %p190 = scmp.lt.s32.totalorder %s25, 0
          %s191 = scalar_select %p190, %s25, 0
          %s192 = sadd.s32 %s191, %s189
          %s193 = smul.addr %s192, 8
          %s194 = scalar_lea.vmem %s0, %s193
          %s195 = smul.u32 4, %s24
        $region20: #{tpu_custom_call.1} parent=15 // pred_fallthru
          _
        // Predicated region
        $region21: #{tpu_custom_call.1} parent=15 // pred_check
          %p196 = pneg %p77
        $region22: #{tpu_custom_call.1} parent=15 // pred_check_branch
          %198 = sbr.rel (%p196) target = $region24
        $region23: #{tpu_custom_call.1} parent=15 // pred_region
          %s199 = smul.u32 4, %s24
          %p200 = scmp.lt.s32.totalorder %s199, 7
          %s201 = scalar_select %p200, %s199, 7
          %s202 = smul.addr %s201, 2
          %s203 = scalar_lea.vmem %s1, %s202
          %s204 = smul.u32 4, %s24
        $region24: #{tpu_custom_call.1} parent=15 // pred_fallthru
          _
        // Predicated region
        $region25: #{tpu_custom_call.1} parent=15 // pred_check
          %p205 = pneg %p103
        $region26: #{tpu_custom_call.1} parent=15 // pred_check_branch
          %207 = sbr.rel (%p205) target = $region28
        $region27: #{tpu_custom_call.1} parent=15 // pred_region
          %s208 = smul.u32 4, %s24
          %p209 = scmp.lt.s32.totalorder %s208, 7
          %s210 = scalar_select %p209, %s208, 7
          %s211 = smul.addr %s210, 2
          %s212 = scalar_lea.vmem %s2, %s211
          %s213 = smul.u32 4, %s24
        $region28: #{tpu_custom_call.1} parent=15 // pred_fallthru
          _
      $region16: #{tpu_custom_call.1} parent=5 // pred_fallthru
        _
      %p214 = scmp.le.s32.totalorder 1, %s17
      %p215 = scmp.lt.s32.totalorder %s17, 3
      %p216 = pnand %p214, %p215
      %p217 = pneg %p216
      // Predicated region
      $region29: #{tpu_custom_call.1} parent=5 // pred_check
        _
      $region30: #{tpu_custom_call.1} parent=5 // pred_check_branch
        %219 = sbr.rel (%p216) target = $region32
      $region31: #{tpu_custom_call.1} parent=5 // pred_region
        %s220 = ssub.s32 %s17, 1
        %s221 = smul.u32 4, %s26
        %p222 = scmp.lt.s32.totalorder %s221, 7
        %s223 = scalar_select %p222, %s221, 7
        %p224 = scmp.lt.s32.totalorder %s27, 0
        %s225 = scalar_select %p224, %s27, 0
        %s226 = sadd.s32 %s225, %s223
        %s227 = smul.addr %s226, 8
        %s228 = scalar_lea.vmem %s0, %s227
        %p229 = pneg %p57
        %p230 = pneg %p54
        %s231 = smul.u32 4, %s26
        %p232 = scmp.lt.s32.totalorder %s231, 7
        %s233 = scalar_select %p232, %s231, 7
        %s234 = smul.addr %s233, 2
        %s235 = scalar_lea.vmem %s1, %s234
        %p236 = pneg %p83
        %p237 = pneg %p80
        %s238 = smul.u32 4, %s26
        %p239 = scmp.lt.s32.totalorder %s238, 7
        %s240 = scalar_select %p239, %s238, 7
        %s241 = smul.addr %s240, 2
        %s242 = scalar_lea.vmem %s2, %s241
        %p243 = pneg %p109
        %p244 = pneg %p106
        %p245 = pneg %p137
        %p246 = pneg %p134
        %s247 = sand.u32 %s124, 1
        %s248 = scalar_lea.sflag [#allocation3], %s247
        %s249 = sand.u32 %s124, 1
        %s250 = smul.addr %s249, 8
        %s251 = scalar_lea.vmem [#allocation2], %s250
        %p252 = pneg %p165
        %p253 = pneg %p162
        %s254 = sand.u32 %s152, 1
        %s255 = scalar_lea.sflag [#allocation5], %s254
        %s256 = sand.u32 %s152, 1
        %s257 = smul.addr %s256, 32
        %s258 = scalar_lea.vmem [#allocation4], %s257
        %s259 = smul.u32 4, %s26
        %p260 = scmp.lt.s32.totalorder %s259, 7
        %s261 = scalar_select %p260, %s259, 7
        %p262 = scmp.lt.s32.totalorder %s27, 0
        %s263 = scalar_select %p262, %s27, 0
        %s264 = sadd.s32 %s263, %s261
        %s265 = smul.addr %s264, 8
        %s266 = scalar_lea.vmem %s0, %s265
        %s267 = smul.u32 4, %s26
        %s268 = smul.u32 4, %s26
        %p269 = scmp.lt.s32.totalorder %s268, 7
        %s270 = scalar_select %p269, %s268, 7
        %s271 = smul.addr %s270, 2
        %s272 = scalar_lea.vmem %s1, %s271
        %s273 = smul.u32 4, %s26
        %s274 = smul.u32 4, %s26
        %p275 = scmp.lt.s32.totalorder %s274, 7
        %s276 = scalar_select %p275, %s274, 7
        %s277 = smul.addr %s276, 2
        %s278 = scalar_lea.vmem %s2, %s277
        %s279 = smul.u32 4, %s26
        %s280 = smul.u32 4, %s26
        %s281 = smul.u32 4, %s26
        %v282 = vld [vmem:[%s266] sm:$0xff]
        %v283 = vld [vmem:[%s266 + $0x8] sm:$0xff]
        %v284 = vld [vmem:[%s266 + $0x10] sm:$0xff]
        %v285 = vld [vmem:[%s266 + $0x18] sm:$0xff]
        %v286 = vmul.f32 %v282, 0.70710677
        %v287 = vmul.f32 %v283, 0.70710677
        %v288 = vmul.f32 %v284, 0.70710677
        %v289 = vmul.f32 %v285, 0.70710677
        %v290 = vld [vmem:[%s272] sm:$0x3]
        %v291 = vld [vmem:[%s272 + $0x2] sm:$0x3]
        %v292 = vld [vmem:[%s272 + $0x4] sm:$0x3]
        %v293 = vld [vmem:[%s272 + $0x6] sm:$0x3]
        %295 = vset.pattern.permute.xlu0 0
        %296 = vperm.xlu0 %295, %v286
        %v297 = vpop.permute.xlu0 %296
        %300 = vset.pattern.permute.xlu0 0
        %301 = vperm.xlu0 %300, %v287
        %v302 = vpop.permute.xlu0 %301
        %305 = vset.pattern.permute.xlu0 0
        %306 = vperm.xlu0 %305, %v288
        %v307 = vpop.permute.xlu0 %306
        %310 = vset.pattern.permute.xlu0 0
        %311 = vperm.xlu0 %310, %v289
        %v312 = vpop.permute.xlu0 %311
        %v314 = vlaneseq
        %v315 = vshrl.u32 %v314, 7
        %v316 = vsub.s32 0, %v315
        %v317 = vrot.slane %v290, %v316
        %v318 = vlaneseq
        %v319 = vshrl.u32 %v318, 7
        %v320 = vsub.s32 0, %v319
        %v321 = vrot.slane %v291, %v320
        %v322 = vlaneseq
        %v323 = vshrl.u32 %v322, 7
        %v324 = vsub.s32 0, %v323
        %v325 = vrot.slane %v292, %v324
        %v326 = vlaneseq
        %v327 = vshrl.u32 %v326, 7
        %v328 = vsub.s32 0, %v327
        %v329 = vrot.slane %v293, %v328
        %v330 = vmul.f32 %v297, %v317
        %v331 = vmul.f32 %v302, %v321
        %v332 = vmul.f32 %v307, %v325
        %v333 = vmul.f32 %v312, %v329
        %334 = vset.pattern.permute.xlu0 1
        %335 = vperm.xlu0 %334, %v286
        %v336 = vpop.permute.xlu0 %335
        %338 = vset.pattern.permute.xlu0 1
        %339 = vperm.xlu0 %338, %v287
        %v340 = vpop.permute.xlu0 %339
        %342 = vset.pattern.permute.xlu0 1
        %343 = vperm.xlu0 %342, %v288
        %v344 = vpop.permute.xlu0 %343
        %346 = vset.pattern.permute.xlu0 1
        %347 = vperm.xlu0 %346, %v289
        %v348 = vpop.permute.xlu0 %347
        %v350 = vlaneseq
        %v351 = vshrl.u32 %v350, 7
        %v352 = vsub.s32 1, %v351
        %v353 = vrot.slane %v290, %v352
        %v354 = vlaneseq
        %v355 = vshrl.u32 %v354, 7
        %v356 = vsub.s32 1, %v355
        %v357 = vrot.slane %v291, %v356
        %v358 = vlaneseq
        %v359 = vshrl.u32 %v358, 7
        %v360 = vsub.s32 1, %v359
        %v361 = vrot.slane %v292, %v360
        %v362 = vlaneseq
        %v363 = vshrl.u32 %v362, 7
        %v364 = vsub.s32 1, %v363
        %v365 = vrot.slane %v293, %v364
        %v366 = vmul.f32 %v336, %v353
        %v367 = vmul.f32 %v340, %v357
        %v368 = vmul.f32 %v344, %v361
        %v369 = vmul.f32 %v348, %v365
        %v370 = vadd.f32 %v330, %v366
        %v371 = vadd.f32 %v331, %v367
        %v372 = vadd.f32 %v332, %v368
        %v373 = vadd.f32 %v333, %v369
        %v374 = vlaneseq
        %v375 = vand.u32 %v374, 127
        %vm376 = vcmp.lt.s32.totalorder %v375, 8
        %v377 = vsel %vm376, %v370, -inf
        %v378 = vsel %vm376, %v371, -inf
        %v379 = vsel %vm376, %v372, -inf
        %v380 = vsel %vm376, %v373, -inf
        %381 = vmax.xlane.f32.xlu0 %v377
        %v382 = vpop.xlane.xlu0 %381
        %383 = vmax.xlane.f32.xlu0 %v378
        %v384 = vpop.xlane.xlu0 %383
        %385 = vmax.xlane.f32.xlu0 %v379
        %v386 = vpop.xlane.xlu0 %385
        %387 = vmax.xlane.f32.xlu0 %v380
        %v388 = vpop.xlane.xlu0 %387
        %v389 = vsub.f32 %v377, %v382
        %v390 = vsub.f32 %v378, %v384
        %v391 = vsub.f32 %v379, %v386
        %v392 = vsub.f32 %v380, %v388
        %v393 = vmul.f32 %v389, 1.442695
        %v394 = vpow.pop %v393
        %v395 = vmul.f32 %v390, 1.442695
        %v396 = vpow.pop %v395
        %v397 = vmul.f32 %v391, 1.442695
        %v398 = vpow.pop %v397
        %v399 = vmul.f32 %v392, 1.442695
        %v400 = vpow.pop %v399
        %401 = vadd.xlane.f32.xlu0 %v394
        %v402 = vpop.xlane.xlu0 %401
        %403 = vadd.xlane.f32.xlu0 %v396
        %v404 = vpop.xlane.xlu0 %403
        %405 = vadd.xlane.f32.xlu0 %v398
        %v406 = vpop.xlane.xlu0 %405
        %407 = vadd.xlane.f32.xlu0 %v400
        %v408 = vpop.xlane.xlu0 %407
        %v409 = vrcp.pop %v402
        %v410 = vmul.f32 1.0, %v409
        %v411 = vrcp.pop %v404
        %v412 = vmul.f32 1.0, %v411
        %v413 = vrcp.pop %v406
        %v414 = vmul.f32 1.0, %v413
        %v415 = vrcp.pop %v408
        %v416 = vmul.f32 1.0, %v415
        %v417 = vmul.f32 %v394, %v410
        %v418 = vmul.f32 %v396, %v412
        %v419 = vmul.f32 %v398, %v414
        %v420 = vmul.f32 %v400, %v416
        %421 = vst [vmem:[%s258] sm:$0xff] %v417
        %422 = vst [vmem:[%s258 + $0x8] sm:$0xff] %v418
        %423 = vst [vmem:[%s258 + $0x10] sm:$0xff] %v419
        %424 = vst [vmem:[%s258 + $0x18] sm:$0xff] %v420
        %v425 = vld [vmem:[%s278] sm:$0x3]
        %v426 = vld [vmem:[%s278 + $0x2] sm:$0x3]
        %v427 = vld [vmem:[%s278 + $0x4] sm:$0x3]
        %v428 = vld [vmem:[%s278 + $0x6] sm:$0x3]
        %429 = vmatprep.subr.mxu0 0.0
        %430 = vmatpush1.xpose.msra.mxu0 %v417
        %431 = vmatprep.subr.mxu0 0.0
        %432 = vmatpush1.xpose.msra.mxu0 0.0
        %433 = vmatprep.subr.mxu0 0.0
        %434 = vmatpush1.xpose.msra.mxu0 0.0
        %435 = vmatprep.subr.mxu0 0.0
        %436 = vmatpush1.xpose.msra.mxu0 0.0
        %437 = vmatprep.subr.mxu0 0.0
        %438 = vmatpush1.xpose.msra.mxu0 0.0
        %439 = vmatprep.subr.mxu0 0.0
        %440 = vmatpush1.xpose.msra.mxu0 0.0
        %441 = vmatprep.subr.mxu0 0.0
        %442 = vmatpush1.xpose.msra.mxu0 0.0
        %443 = vmatprep.subr.mxu0 0.0
        %444 = vmatpush1.xpose.msra.mxu0 0.0
        %445 = vmatprep.subr.mxu0 0.0
        %446 = vmatpush1.xpose.msra.mxu0 0.0
        %447 = vmatprep.subr.mxu0 0.0
        %448 = vmatpush1.xpose.msra.mxu0 0.0
        %449 = vmatprep.subr.mxu0 0.0
        %450 = vmatpush1.xpose.msra.mxu0 0.0
        %451 = vmatprep.subr.mxu0 0.0
        %452 = vmatpush1.xpose.msra.mxu0 0.0
        %453 = vmatprep.subr.mxu0 0.0
        %454 = vmatpush1.xpose.msra.mxu0 0.0
        %455 = vmatprep.subr.mxu0 0.0
        %456 = vmatpush1.xpose.msra.mxu0 0.0
        %457 = vmatprep.subr.mxu0 0.0
        %458 = vmatpush1.xpose.msra.mxu0 0.0
        %459 = vmatprep.subr.mxu0 0.0
        %460 = vmatpush1.xpose.msra.mxu0 0.0
        %461 = vmatprep.subr.mxu0 0.0
        %462 = vmatpush1.xpose.msra.mxu0 0.0
        %463 = vmatprep.subr.mxu0 0.0
        %464 = vmatpush1.xpose.msra.mxu0 0.0
        %465 = vmatprep.subr.mxu0 0.0
        %466 = vmatpush1.xpose.msra.mxu0 0.0
        %467 = vmatprep.subr.mxu0 0.0
        %468 = vmatpush1.xpose.msra.mxu0 0.0
        %469 = vmatprep.subr.mxu0 0.0
        %470 = vmatpush1.xpose.msra.mxu0 0.0
        %471 = vmatprep.subr.mxu0 0.0
        %472 = vmatpush1.xpose.msra.mxu0 0.0
        %473 = vmatprep.subr.mxu0 0.0
        %474 = vmatpush1.xpose.msra.mxu0 0.0
        %475 = vmatprep.subr.mxu0 0.0
        %476 = vmatpush1.xpose.msra.mxu0 0.0
        %477 = vmatprep.subr.mxu0 0.0
        %478 = vmatpush1.xpose.msra.mxu0 0.0
        %479 = vmatprep.subr.mxu0 0.0
        %480 = vmatpush1.xpose.msra.mxu0 0.0
        %481 = vmatprep.subr.mxu0 0.0
        %482 = vmatpush1.xpose.msra.mxu0 0.0
        %483 = vmatprep.subr.mxu0 0.0
        %484 = vmatpush1.xpose.msra.mxu0 0.0
        %485 = vmatprep.subr.mxu0 0.0
        %486 = vmatpush1.xpose.msra.mxu0 0.0
        %487 = vmatprep.subr.mxu0 0.0
        %488 = vmatpush1.xpose.msra.mxu0 0.0
        %489 = vmatprep.subr.mxu0 0.0
        %490 = vmatpush1.xpose.msra.mxu0 0.0
        %491 = vmatprep.subr.mxu0 0.0
        %492 = vmatpush1.xpose.msra.mxu0 0.0
        %493 = vmatprep.mubr.f32.mxu0 0.0
        %494 = vmatmul.mubr.f32.gmra.mrb[0].mxu0 %v425
        %v495 = vpop.f32.mrb[0].mxu0
        %v496 = vadd.f32 0.0, %v495
        %v497 = vpop.f32.mrb[0].mxu0
        %498 = vdwg.mxu0
        %499 = vmatprep.subr.mxu0 0.0
        %500 = vmatpush1.xpose.msra.mxu0 %v418
        %501 = vmatprep.subr.mxu0 0.0
        %502 = vmatpush1.xpose.msra.mxu0 0.0
        %503 = vmatprep.subr.mxu0 0.0
        %504 = vmatpush1.xpose.msra.mxu0 0.0
        %505 = vmatprep.subr.mxu0 0.0
        %506 = vmatpush1.xpose.msra.mxu0 0.0
        %507 = vmatprep.subr.mxu0 0.0
        %508 = vmatpush1.xpose.msra.mxu0 0.0
        %509 = vmatprep.subr.mxu0 0.0
        %510 = vmatpush1.xpose.msra.mxu0 0.0
        %511 = vmatprep.subr.mxu0 0.0
        %512 = vmatpush1.xpose.msra.mxu0 0.0
        %513 = vmatprep.subr.mxu0 0.0
        %514 = vmatpush1.xpose.msra.mxu0 0.0
        %515 = vmatprep.subr.mxu0 0.0
        %516 = vmatpush1.xpose.msra.mxu0 0.0
        %517 = vmatprep.subr.mxu0 0.0
        %518 = vmatpush1.xpose.msra.mxu0 0.0
        %519 = vmatprep.subr.mxu0 0.0
        %520 = vmatpush1.xpose.msra.mxu0 0.0
        %521 = vmatprep.subr.mxu0 0.0
        %522 = vmatpush1.xpose.msra.mxu0 0.0
        %523 = vmatprep.subr.mxu0 0.0
        %524 = vmatpush1.xpose.msra.mxu0 0.0
        %525 = vmatprep.subr.mxu0 0.0
        %526 = vmatpush1.xpose.msra.mxu0 0.0
        %527 = vmatprep.subr.mxu0 0.0
        %528 = vmatpush1.xpose.msra.mxu0 0.0
        %529 = vmatprep.subr.mxu0 0.0
        %530 = vmatpush1.xpose.msra.mxu0 0.0
        %531 = vmatprep.subr.mxu0 0.0
        %532 = vmatpush1.xpose.msra.mxu0 0.0
        %533 = vmatprep.subr.mxu0 0.0
        %534 = vmatpush1.xpose.msra.mxu0 0.0
        %535 = vmatprep.subr.mxu0 0.0
        %536 = vmatpush1.xpose.msra.mxu0 0.0
        %537 = vmatprep.subr.mxu0 0.0
        %538 = vmatpush1.xpose.msra.mxu0 0.0
        %539 = vmatprep.subr.mxu0 0.0
        %540 = vmatpush1.xpose.msra.mxu0 0.0
        %541 = vmatprep.subr.mxu0 0.0
        %542 = vmatpush1.xpose.msra.mxu0 0.0
        %543 = vmatprep.subr.mxu0 0.0
        %544 = vmatpush1.xpose.msra.mxu0 0.0
        %545 = vmatprep.subr.mxu0 0.0
        %546 = vmatpush1.xpose.msra.mxu0 0.0
        %547 = vmatprep.subr.mxu0 0.0
        %548 = vmatpush1.xpose.msra.mxu0 0.0
        %549 = vmatprep.subr.mxu0 0.0
        %550 = vmatpush1.xpose.msra.mxu0 0.0
        %551 = vmatprep.subr.mxu0 0.0
        %552 = vmatpush1.xpose.msra.mxu0 0.0
        %553 = vmatprep.subr.mxu0 0.0
        %554 = vmatpush1.xpose.msra.mxu0 0.0
        %555 = vmatprep.subr.mxu0 0.0
        %556 = vmatpush1.xpose.msra.mxu0 0.0
        %557 = vmatprep.subr.mxu0 0.0
        %558 = vmatpush1.xpose.msra.mxu0 0.0
        %559 = vmatprep.subr.mxu0 0.0
        %560 = vmatpush1.xpose.msra.mxu0 0.0
        %561 = vmatprep.subr.mxu0 0.0
        %562 = vmatpush1.xpose.msra.mxu0 0.0
        %563 = vmatprep.mubr.f32.mxu0 0.0
        %564 = vmatmul.mubr.f32.gmra.mrb[0].mxu0 %v426
        %v565 = vpop.f32.mrb[0].mxu0
        %v566 = vadd.f32 0.0, %v565
        %v567 = vpop.f32.mrb[0].mxu0
        %568 = vdwg.mxu0
        %569 = vmatprep.subr.mxu0 0.0
        %570 = vmatpush1.xpose.msra.mxu0 %v419
        %571 = vmatprep.subr.mxu0 0.0
        %572 = vmatpush1.xpose.msra.mxu0 0.0
        %573 = vmatprep.subr.mxu0 0.0
        %574 = vmatpush1.xpose.msra.mxu0 0.0
        %575 = vmatprep.subr.mxu0 0.0
        %576 = vmatpush1.xpose.msra.mxu0 0.0
        %577 = vmatprep.subr.mxu0 0.0
        %578 = vmatpush1.xpose.msra.mxu0 0.0
        %579 = vmatprep.subr.mxu0 0.0
        %580 = vmatpush1.xpose.msra.mxu0 0.0
        %581 = vmatprep.subr.mxu0 0.0
        %582 = vmatpush1.xpose.msra.mxu0 0.0
        %583 = vmatprep.subr.mxu0 0.0
        %584 = vmatpush1.xpose.msra.mxu0 0.0
        %585 = vmatprep.subr.mxu0 0.0
        %586 = vmatpush1.xpose.msra.mxu0 0.0
        %587 = vmatprep.subr.mxu0 0.0
        %588 = vmatpush1.xpose.msra.mxu0 0.0
        %589 = vmatprep.subr.mxu0 0.0
        %590 = vmatpush1.xpose.msra.mxu0 0.0
        %591 = vmatprep.subr.mxu0 0.0
        %592 = vmatpush1.xpose.msra.mxu0 0.0
        %593 = vmatprep.subr.mxu0 0.0
        %594 = vmatpush1.xpose.msra.mxu0 0.0
        %595 = vmatprep.subr.mxu0 0.0
        %596 = vmatpush1.xpose.msra.mxu0 0.0
        %597 = vmatprep.subr.mxu0 0.0
        %598 = vmatpush1.xpose.msra.mxu0 0.0
        %599 = vmatprep.subr.mxu0 0.0
        %600 = vmatpush1.xpose.msra.mxu0 0.0
        %601 = vmatprep.subr.mxu0 0.0
        %602 = vmatpush1.xpose.msra.mxu0 0.0
        %603 = vmatprep.subr.mxu0 0.0
        %604 = vmatpush1.xpose.msra.mxu0 0.0
        %605 = vmatprep.subr.mxu0 0.0
        %606 = vmatpush1.xpose.msra.mxu0 0.0
        %607 = vmatprep.subr.mxu0 0.0
        %608 = vmatpush1.xpose.msra.mxu0 0.0
        %609 = vmatprep.subr.mxu0 0.0
        %610 = vmatpush1.xpose.msra.mxu0 0.0
        %611 = vmatprep.subr.mxu0 0.0
        %612 = vmatpush1.xpose.msra.mxu0 0.0
        %613 = vmatprep.subr.mxu0 0.0
        %614 = vmatpush1.xpose.msra.mxu0 0.0
        %615 = vmatprep.subr.mxu0 0.0
        %616 = vmatpush1.xpose.msra.mxu0 0.0
        %617 = vmatprep.subr.mxu0 0.0
        %618 = vmatpush1.xpose.msra.mxu0 0.0
        %619 = vmatprep.subr.mxu0 0.0
        %620 = vmatpush1.xpose.msra.mxu0 0.0
        %621 = vmatprep.subr.mxu0 0.0
        %622 = vmatpush1.xpose.msra.mxu0 0.0
        %623 = vmatprep.subr.mxu0 0.0
        %624 = vmatpush1.xpose.msra.mxu0 0.0
        %625 = vmatprep.subr.mxu0 0.0
        %626 = vmatpush1.xpose.msra.mxu0 0.0
        %627 = vmatprep.subr.mxu0 0.0
        %628 = vmatpush1.xpose.msra.mxu0 0.0
        %629 = vmatprep.subr.mxu0 0.0
        %630 = vmatpush1.xpose.msra.mxu0 0.0
        %631 = vmatprep.subr.mxu0 0.0
        %632 = vmatpush1.xpose.msra.mxu0 0.0
        %633 = vmatprep.mubr.f32.mxu0 0.0
        %634 = vmatmul.mubr.f32.gmra.mrb[0].mxu0 %v427
        %v635 = vpop.f32.mrb[0].mxu0
        %v636 = vadd.f32 0.0, %v635
        %v637 = vpop.f32.mrb[0].mxu0
        %638 = vdwg.mxu0
        %639 = vmatprep.subr.mxu0 0.0
        %640 = vmatpush1.xpose.msra.mxu0 %v420
        %641 = vmatprep.subr.mxu0 0.0
        %642 = vmatpush1.xpose.msra.mxu0 0.0
        %643 = vmatprep.subr.mxu0 0.0
        %644 = vmatpush1.xpose.msra.mxu0 0.0
        %645 = vmatprep.subr.mxu0 0.0
        %646 = vmatpush1.xpose.msra.mxu0 0.0
        %647 = vmatprep.subr.mxu0 0.0
        %648 = vmatpush1.xpose.msra.mxu0 0.0
        %649 = vmatprep.subr.mxu0 0.0
        %650 = vmatpush1.xpose.msra.mxu0 0.0
        %651 = vmatprep.subr.mxu0 0.0
        %652 = vmatpush1.xpose.msra.mxu0 0.0
        %653 = vmatprep.subr.mxu0 0.0
        %654 = vmatpush1.xpose.msra.mxu0 0.0
        %655 = vmatprep.subr.mxu0 0.0
        %656 = vmatpush1.xpose.msra.mxu0 0.0
        %657 = vmatprep.subr.mxu0 0.0
        %658 = vmatpush1.xpose.msra.mxu0 0.0
        %659 = vmatprep.subr.mxu0 0.0
        %660 = vmatpush1.xpose.msra.mxu0 0.0
        %661 = vmatprep.subr.mxu0 0.0
        %662 = vmatpush1.xpose.msra.mxu0 0.0
        %663 = vmatprep.subr.mxu0 0.0
        %664 = vmatpush1.xpose.msra.mxu0 0.0
        %665 = vmatprep.subr.mxu0 0.0
        %666 = vmatpush1.xpose.msra.mxu0 0.0
        %667 = vmatprep.subr.mxu0 0.0
        %668 = vmatpush1.xpose.msra.mxu0 0.0
        %669 = vmatprep.subr.mxu0 0.0
        %670 = vmatpush1.xpose.msra.mxu0 0.0
        %671 = vmatprep.subr.mxu0 0.0
        %672 = vmatpush1.xpose.msra.mxu0 0.0
        %673 = vmatprep.subr.mxu0 0.0
        %674 = vmatpush1.xpose.msra.mxu0 0.0
        %675 = vmatprep.subr.mxu0 0.0
        %676 = vmatpush1.xpose.msra.mxu0 0.0
        %677 = vmatprep.subr.mxu0 0.0
        %678 = vmatpush1.xpose.msra.mxu0 0.0
        %679 = vmatprep.subr.mxu0 0.0
        %680 = vmatpush1.xpose.msra.mxu0 0.0
        %681 = vmatprep.subr.mxu0 0.0
        %682 = vmatpush1.xpose.msra.mxu0 0.0
        %683 = vmatprep.subr.mxu0 0.0
        %684 = vmatpush1.xpose.msra.mxu0 0.0
        %685 = vmatprep.subr.mxu0 0.0
        %686 = vmatpush1.xpose.msra.mxu0 0.0
        %687 = vmatprep.subr.mxu0 0.0
        %688 = vmatpush1.xpose.msra.mxu0 0.0
        %689 = vmatprep.subr.mxu0 0.0
        %690 = vmatpush1.xpose.msra.mxu0 0.0
        %691 = vmatprep.subr.mxu0 0.0
        %692 = vmatpush1.xpose.msra.mxu0 0.0
        %693 = vmatprep.subr.mxu0 0.0
        %694 = vmatpush1.xpose.msra.mxu0 0.0
        %695 = vmatprep.subr.mxu0 0.0
        %696 = vmatpush1.xpose.msra.mxu0 0.0
        %697 = vmatprep.subr.mxu0 0.0
        %698 = vmatpush1.xpose.msra.mxu0 0.0
        %699 = vmatprep.subr.mxu0 0.0
        %700 = vmatpush1.xpose.msra.mxu0 0.0
        %701 = vmatprep.subr.mxu0 0.0
        %702 = vmatpush1.xpose.msra.mxu0 0.0
        %703 = vmatprep.mubr.f32.mxu0 0.0
        %704 = vmatmul.mubr.f32.gmra.mrb[0].mxu0 %v428
        %v705 = vpop.f32.mrb[0].mxu0
        %v706 = vadd.f32 0.0, %v705
        %v707 = vpop.f32.mrb[0].mxu0
        %708 = vdwg.mxu0
        %vm709 = vcmask 58368
        %710 = vst.msk [vmem:[%s251] sm:$0x3] %vm709, %v496
        %711 = vst.msk [vmem:[%s251 + $0x2] sm:$0x3] %vm709, %v566
        %712 = vst.msk [vmem:[%s251 + $0x4] sm:$0x3] %vm709, %v636
        %713 = vst.msk [vmem:[%s251 + $0x6] sm:$0x3] %vm709, %v706
        %s714 = sand.u32 %s124, 1
        %s715 = scalar_lea.sflag [#allocation3], %s714
        %s716 = sand.u32 %s124, 1
        %s717 = smul.addr %s716, 8
        %s718 = scalar_lea.vmem [#allocation2], %s717
        %s719 = sand.u32 %s152, 1
        %s720 = scalar_lea.sflag [#allocation5], %s719
        %s721 = sand.u32 %s152, 1
        %s722 = smul.addr %s721, 32
        %s723 = scalar_lea.vmem [#allocation4], %s722
        // Predicated region
        $region33: #{tpu_custom_call.1} parent=31 // pred_check
          %p724 = pneg %p134
        $region34: #{tpu_custom_call.1} parent=31 // pred_check_branch
          %726 = sbr.rel (%p724) target = $region36
        $region35: #{tpu_custom_call.1} parent=31 // pred_region
          %s727 = smul.u32 4, %s26
          %s729 = ssub.s32 128, 128
          %730 = vsyncadd %s715, %s729
          %s731 = sadd.s32 %s27, %s727
          %s732 = smul.addr %s731, 32
          %s733 = scalar_lea.hbm %s3, %s732
          %s734 = sshll.u32 %s718, 4
          %s735 = int_to_ptr.vmem [resolvable:$true] %s734
          %740 = dma.vmem_to_hbm [thread:$0]  %s735, 128, %s733, %s715, 32, 32, 2
        $region36: #{tpu_custom_call.1} parent=31 // pred_fallthru
          _
        // Predicated region
        $region37: #{tpu_custom_call.1} parent=31 // pred_check
          %p741 = pneg %p162
        $region38: #{tpu_custom_call.1} parent=31 // pred_check_branch
          %743 = sbr.rel (%p741) target = $region40
        $region39: #{tpu_custom_call.1} parent=31 // pred_region
          %s744 = smul.u32 4, %s26
          %s746 = ssub.s32 512, 512
          %747 = vsyncadd %s720, %s746
          %s748 = sadd.s32 %s27, %s744
          %s749 = smul.addr %s748, 128
          %s750 = scalar_lea.hbm %s4, %s749
          %s751 = sshll.u32 %s723, 4
          %s752 = int_to_ptr.vmem [resolvable:$true] %s751
          %757 = dma.vmem_to_hbm [thread:$0]  %s752, 512, %s750, %s720, 128, 128, 8
        $region40: #{tpu_custom_call.1} parent=31 // pred_fallthru
          _
      $region32: #{tpu_custom_call.1} parent=5 // pred_fallthru
        _
      %p758 = scmp.le.s32.totalorder 2, %s17
      // Predicated region
      $region41: #{tpu_custom_call.1} parent=5 // pred_check
        %p759 = pneg %p758
      $region42: #{tpu_custom_call.1} parent=5 // pred_check_branch
        %761 = sbr.rel (%p759) target = $region44
      $region43: #{tpu_custom_call.1} parent=5 // pred_region
        %s762 = ssub.s32 %s17, 2
        // Predicated region
        $region45: #{tpu_custom_call.1} parent=43 // pred_check
          %p763 = pneg %p140
        $region46: #{tpu_custom_call.1} parent=43 // pred_check_branch
          %765 = sbr.rel (%p763) target = $region48
        $region47: #{tpu_custom_call.1} parent=43 // pred_region
          %s766 = sand.u32 %s125, 1
          %s767 = scalar_lea.sflag [#allocation3], %s766
          %s768 = sand.u32 %s125, 1
          %s769 = smul.addr %s768, 8
          %s770 = scalar_lea.vmem [#allocation2], %s769
          %771 = dma.done %s767, 128
        $region48: #{tpu_custom_call.1} parent=43 // pred_fallthru
          _
        // Predicated region
        $region49: #{tpu_custom_call.1} parent=43 // pred_check
          %p772 = pneg %p168
        $region50: #{tpu_custom_call.1} parent=43 // pred_check_branch
          %774 = sbr.rel (%p772) target = $region52
        $region51: #{tpu_custom_call.1} parent=43 // pred_region
          %s775 = sand.u32 %s153, 1
          %s776 = scalar_lea.sflag [#allocation5], %s775
          %s777 = sand.u32 %s153, 1
          %s778 = smul.addr %s777, 32
          %s779 = scalar_lea.vmem [#allocation4], %s778
          %780 = dma.done %s776, 512
        $region52: #{tpu_custom_call.1} parent=43 // pred_fallthru
          _
      $region44: #{tpu_custom_call.1} parent=5 // pred_fallthru
        _
    $region6: #{tpu_custom_call.1} parent=1 // loop_footer
      %s21 = sadd.s32 1, %s17
    $region7: #{tpu_custom_call.1} parent=1 // loop_footer_branch
      %16 = sbr.rel target = $region3
    $region8: #{tpu_custom_call.1} parent=1 // loop_exit
      _
    %781 = vsyncpa [#allocation3], 1
    %s782 = scalar_lea.sflag [#allocation3], 1
    %783 = vsyncpa %s782, 1
    %784 = vsyncpa [#allocation5], 1
    %s785 = scalar_lea.sflag [#allocation5], 1
    %786 = vsyncpa %s785, 1

</llo_original>
